<compile_context>
chip_gen: v6e
topology: v6e:2x2x1
jax: 0.10.0
libtpu: 0.0.40
codegen_flags: <defaults>
</compile_context>

<pallas_src>
import functools

import jax
import jax.numpy as jnp
from jax.experimental import pallas as pl
from jax.experimental.pallas import tpu as pltpu

LN_EPS = 1e-5


def _round_up(n, m):
    return pl.cdiv(n, m) * m


def feedforward_kernel(x_ref, gamma_ref, beta_ref, w1_ref, b1_ref,
                       w2_ref, b2_ref, o_ref, xn_ref, acc_ref):
    """Fused LN + Linear1 + Swish + Linear2 over one (row-tile, E-tile)."""
    e = pl.program_id(1)
    n_e = pl.num_programs(1)

    # --- once per row tile: LayerNorm in f32, cache bf16 copy for the MXU ---
    @pl.when(e == 0)
    def _():
        x = x_ref[...].astype(jnp.float32)                    # (tm, D)
        mean = jnp.mean(x, axis=-1, keepdims=True)
        var = jnp.mean(jnp.square(x - mean), axis=-1, keepdims=True)
        xn = (x - mean) * jax.lax.rsqrt(var + LN_EPS)
        xn = xn * gamma_ref[...].astype(jnp.float32) \
                + beta_ref[...].astype(jnp.float32)
        xn_ref[...] = xn.astype(xn_ref.dtype)                 # bf16 cache
        acc_ref[...] = jnp.zeros_like(acc_ref)                # f32 accumulator

    # --- Linear 1 chunk: (tm, D)bf16 @ (D, te)bf16 -> f32 ---
    h = jnp.dot(xn_ref[...], w1_ref[...],
                preferred_element_type=jnp.float32)
    h = h + b1_ref[...].astype(jnp.float32)

    # --- Swish: h * sigmoid(h), in f32 (sigmoid goes to the EUP slot) ---
    h = h * jax.nn.sigmoid(h)

    # Dropout(p=0.1): identity in inference mode.
    # TODO(synk): training-mode dropout (pltpu.prng_* masking) not implemented.

    # --- Linear 2 chunk: (tm, te)bf16 @ (te, D)bf16, accumulate in f32 ---
    acc_ref[...] += jnp.dot(h.astype(w2_ref.dtype), w2_ref[...],
                            preferred_element_type=jnp.float32)

    # --- finalize: add output bias and write back once per row tile ---
    @pl.when(e == n_e - 1)
    def _():
        y = acc_ref[...] + b2_ref[...].astype(jnp.float32)
        o_ref[...] = y.astype(o_ref.dtype)


@functools.partial(jax.jit, static_argnames=("tm", "te"))
def feedforward(x, gamma, beta, w1, b1, w2, b2, *, tm=256, te=512):
    """x: (B, S, D) -> (B, S, D). Weights are (in, out) layout, any float dtype."""
    B, S, D = x.shape
    E = w1.shape[1]
    M = B * S

    # Clamp tiles to the problem size, keeping sublane alignment (16 covers
    # both the f32 (8,128) and bf16 (16,128) tiling constraints).
    tm = min(tm, _round_up(M, 16))
    te = min(te, E)

    # Pad M to a multiple of tm (garbage rows are sliced off at the end) and
    # E to a multiple of te (zero-padded hidden units contribute exactly 0).
    Mp = _round_up(M, tm)
    Ep = _round_up(E, te)

    x2d = x.reshape(M, D)
    if Mp != M:
        x2d = jnp.pad(x2d, ((0, Mp - M), (0, 0)))

    # bf16 weights -> native fast MXU path + half the weight DMA traffic.
    w1b = w1.astype(jnp.bfloat16)
    w2b = w2.astype(jnp.bfloat16)
    if Ep != E:
        w1b = jnp.pad(w1b, ((0, 0), (0, Ep - E)))
        b1 = jnp.pad(b1, ((0, 0), (0, Ep - E)))
        w2b = jnp.pad(w2b, ((0, Ep - E), (0, 0)))

    grid = (Mp // tm, Ep // te)

    cost = pl.CostEstimate(
        flops=4 * Mp * D * Ep,                       # two matmuls
        transcendentals=Mp * Ep,                     # sigmoid
        bytes_accessed=2 * Mp * D * 4                # x in + y out (f32)
                       + 2 * D * Ep * 2              # W1 + W2 (bf16)
                       + (3 * D + Ep) * 4,           # gamma/beta/b2 + b1
    )

    out2d = pl.pallas_call(
        feedforward_kernel,
        out_shape=jax.ShapeDtypeStruct((Mp, D), x.dtype),
        grid_spec=pltpu.PrefetchScalarGridSpec(
            num_scalar_prefetch=0,
            grid=grid,
            in_specs=[
                pl.BlockSpec((tm, D), lambda i, e: (i, 0)),    # x rows
                pl.BlockSpec((1, D), lambda i, e: (0, 0)),     # LN gamma
                pl.BlockSpec((1, D), lambda i, e: (0, 0)),     # LN beta
                pl.BlockSpec((D, te), lambda i, e: (0, e)),    # W1 (in, out) E-tile
                pl.BlockSpec((1, te), lambda i, e: (0, e)),    # b1 E-tile
                pl.BlockSpec((te, D), lambda i, e: (e, 0)),    # W2 (in, out) E-tile
                pl.BlockSpec((1, D), lambda i, e: (0, 0)),     # b2
            ],
            out_specs=pl.BlockSpec((tm, D), lambda i, e: (i, 0)),
            scratch_shapes=[
                pltpu.VMEM((tm, D), jnp.bfloat16),   # cached LN output
                pltpu.VMEM((tm, D), jnp.float32),    # output accumulator
            ],
        ),
        compiler_params=pltpu.CompilerParams(
            dimension_semantics=("parallel", "arbitrary")),
        cost_estimate=cost,
    )(x2d, gamma, beta, w1b, b1, w2b, b2)

    return out2d[:M].reshape(B, S, D)


def xavier_uniform(key, out_features, in_features, dtype=jnp.float32):
    """Matches torch.nn.init.xavier_uniform_ for a (out, in) weight."""
    limit = (6.0 / (in_features + out_features)) ** 0.5
    return jax.random.uniform(key, (out_features, in_features), dtype,
                              minval=-limit, maxval=limit)


def init_params(key, embed_dim, expansion_factor=4, dtype=jnp.float32):
    expanded = int(embed_dim * expansion_factor)
    k1, k2 = jax.random.split(key)

    gamma = jnp.ones((1, embed_dim), dtype)           # LayerNorm weight
    beta = jnp.zeros((1, embed_dim), dtype)           # LayerNorm bias

    w1_t = xavier_uniform(k1, expanded, embed_dim, dtype)   # (out, in)
    b1 = jnp.zeros((1, expanded), dtype)
    w2_t = xavier_uniform(k2, embed_dim, expanded, dtype)   # (out, in)
    b2 = jnp.zeros((1, embed_dim), dtype)

    # kernel expects (in, out) layout
    return gamma, beta, w1_t.T, b1, w2_t.T, b2


def reference(x, gamma, beta, w1, b1, w2, b2):
    """Pure-JAX reference with matching numerics (bf16 MXU ops, f32 accum,
    dropout = identity)."""
    B, S, D = x.shape
    xf = x.reshape(B * S, D).astype(jnp.float32)
    mean = jnp.mean(xf, axis=-1, keepdims=True)
    var = jnp.mean(jnp.square(xf - mean), axis=-1, keepdims=True)
    xn = (xf - mean) * jax.lax.rsqrt(var + LN_EPS)
    xn = xn * gamma[0] + beta[0]
    h = jnp.dot(xn.astype(jnp.bfloat16), w1.astype(jnp.bfloat16),
                preferred_element_type=jnp.float32) + b1[0]
    h = h * jax.nn.sigmoid(h)
    y = jnp.dot(h.astype(jnp.bfloat16), w2.astype(jnp.bfloat16),
                preferred_element_type=jnp.float32) + b2[0]
    return y.reshape(B, S, D).astype(x.dtype)


if __name__ == "__main__":
    key = jax.random.PRNGKey(0)
    k_x, k_p = jax.random.split(key)

    # batch=2, seq=64, embed_dim=128 (lane-dense D), expanded=512
    B, S, D = 2, 64, 128
    x = jax.random.normal(k_x, (B, S, D), jnp.float32)

    params = init_params(k_p, embed_dim=D, expansion_factor=4)

    # Small tiles so the demo exercises multiple grid steps on both axes
    # (init / accumulate / finalize paths).  Real deployments: tm=256, te=512.
    out = feedforward(x, *params, tm=64, te=256)
    out = jax.block_until_ready(out)

    ref = reference(x, *params)
    assert out.shape == (B, S, D)
    assert jnp.allclose(out, ref, atol=1e-3, rtol=1e-3), "mismatch vs reference"

    print("KERNEL_OK")
</pallas_src>

<mosaic_0001>
module attributes {stable_mosaic.version = 11 : i64} {
  func.func @feedforward_kernel(%arg0: i32, %arg1: i32, %arg2: memref<64x128xf32, #tpu.memory_space<vmem>>, %arg3: memref<1x128xf32, #tpu.memory_space<vmem>>, %arg4: memref<1x128xf32, #tpu.memory_space<vmem>>, %arg5: memref<128x256xbf16, #tpu.memory_space<vmem>>, %arg6: memref<1x256xf32, #tpu.memory_space<vmem>>, %arg7: memref<256x128xbf16, #tpu.memory_space<vmem>>, %arg8: memref<1x128xf32, #tpu.memory_space<vmem>>, %arg9: memref<64x128xf32, #tpu.memory_space<vmem>>, %arg10: memref<64x128xbf16, #tpu.memory_space<vmem>>, %arg11: memref<64x128xf32, #tpu.memory_space<vmem>>) attributes {dimension_semantics = [#tpu.dimension_semantics<parallel>, #tpu.dimension_semantics<arbitrary>], iteration_bounds = array<i64: 2, 2>, scalar_prefetch = 0 : i64, scratch_operands = 2 : i64, tpu.core_type = #tpu.core_type<tc>, window_params = [{transform_indices = @transform_0, window_bounds = array<i64: 64, 128>}, {pipeline_mode = #tpu.pipeline_mode<synchronous>, transform_indices = @transform_1, window_bounds = array<i64: 1, 128>}, {pipeline_mode = #tpu.pipeline_mode<synchronous>, transform_indices = @transform_2, window_bounds = array<i64: 1, 128>}, {transform_indices = @transform_3, window_bounds = array<i64: 128, 256>}, {transform_indices = @transform_4, window_bounds = array<i64: 1, 256>}, {transform_indices = @transform_5, window_bounds = array<i64: 256, 128>}, {pipeline_mode = #tpu.pipeline_mode<synchronous>, transform_indices = @transform_6, window_bounds = array<i64: 1, 128>}, {transform_indices = @transform_7, window_bounds = array<i64: 64, 128>}]} {
    %c0_i32 = arith.constant 0 : i32
    %0 = arith.cmpi eq, %arg1, %c0_i32 : i32
    %1 = arith.extui %0 : i1 to i32
    %c0_i32_0 = arith.constant 0 : i32
    %2 = arith.cmpi ne, %1, %c0_i32_0 : i32
    scf.if %2 {
      %c0_15 = arith.constant 0 : index
      %c0_16 = arith.constant 0 : index
      %24 = vector.load %arg2[%c0_15, %c0_16] : memref<64x128xf32, #tpu.memory_space<vmem>>, vector<64x128xf32>
      %cst_17 = arith.constant dense<0.000000e+00> : vector<64xf32>
      %25 = vector.multi_reduction <add>, %24, %cst_17 [1] : vector<64x128xf32> to vector<64xf32>
      %26 = vector.shape_cast %25 : vector<64xf32> to vector<64x1xf32>
      %cst_18 = arith.constant 1.280000e+02 : f32
      %27 = vector.broadcast %cst_18 : f32 to vector<64x1xf32>
      %28 = arith.divf %26, %27 : vector<64x1xf32>
      %29 = vector.broadcast %28 : vector<64x1xf32> to vector<64x128xf32>
      %30 = arith.subf %24, %29 : vector<64x128xf32>
      %31 = arith.mulf %30, %30 : vector<64x128xf32>
      %cst_19 = arith.constant dense<0.000000e+00> : vector<64xf32>
      %32 = vector.multi_reduction <add>, %31, %cst_19 [1] : vector<64x128xf32> to vector<64xf32>
      %33 = vector.shape_cast %32 : vector<64xf32> to vector<64x1xf32>
      %cst_20 = arith.constant 1.280000e+02 : f32
      %34 = vector.broadcast %cst_20 : f32 to vector<64x1xf32>
      %35 = arith.divf %33, %34 : vector<64x1xf32>
      %36 = vector.broadcast %28 : vector<64x1xf32> to vector<64x128xf32>
      %37 = arith.subf %24, %36 : vector<64x128xf32>
      %cst_21 = arith.constant 9.99999974E-6 : f32
      %38 = vector.broadcast %cst_21 : f32 to vector<64x1xf32>
      %39 = arith.addf %35, %38 : vector<64x1xf32>
      %40 = math.rsqrt %39 : vector<64x1xf32>
      %41 = vector.broadcast %40 : vector<64x1xf32> to vector<64x128xf32>
      %42 = arith.mulf %37, %41 : vector<64x128xf32>
      %c0_22 = arith.constant 0 : index
      %c0_23 = arith.constant 0 : index
      %43 = vector.load %arg3[%c0_22, %c0_23] : memref<1x128xf32, #tpu.memory_space<vmem>>, vector<1x128xf32>
      %44 = vector.broadcast %43 : vector<1x128xf32> to vector<64x128xf32>
      %45 = arith.mulf %42, %44 : vector<64x128xf32>
      %c0_24 = arith.constant 0 : index
      %c0_25 = arith.constant 0 : index
      %46 = vector.load %arg4[%c0_24, %c0_25] : memref<1x128xf32, #tpu.memory_space<vmem>>, vector<1x128xf32>
      %47 = vector.broadcast %46 : vector<1x128xf32> to vector<64x128xf32>
      %48 = arith.addf %45, %47 : vector<64x128xf32>
      %49 = arith.truncf %48 : vector<64x128xf32> to vector<64x128xbf16>
      %c0_26 = arith.constant 0 : index
      %c0_27 = arith.constant 0 : index
      %50 = vector.load %arg10[%c0_26, %c0_27] : memref<64x128xbf16, #tpu.memory_space<vmem>>, vector<64x128xbf16>
      tpu.vector_store %arg10[%c0_26, %c0_27], %49 {strides = array<i32>} : memref<64x128xbf16, #tpu.memory_space<vmem>>, vector<64x128xbf16>,
      %cst_28 = arith.constant 0.000000e+00 : f32
      %51 = vector.broadcast %cst_28 : f32 to vector<64x128xf32>
      %c0_29 = arith.constant 0 : index
      %c0_30 = arith.constant 0 : index
      %52 = vector.load %arg11[%c0_29, %c0_30] : memref<64x128xf32, #tpu.memory_space<vmem>>, vector<64x128xf32>
      tpu.vector_store %arg11[%c0_29, %c0_30], %51 {strides = array<i32>} : memref<64x128xf32, #tpu.memory_space<vmem>>, vector<64x128xf32>,
    } else {
    }
    %c0 = arith.constant 0 : index
    %c0_1 = arith.constant 0 : index
    %3 = vector.load %arg10[%c0, %c0_1] : memref<64x128xbf16, #tpu.memory_space<vmem>>, vector<64x128xbf16>
    %c0_2 = arith.constant 0 : index
    %c0_3 = arith.constant 0 : index
    %4 = vector.load %arg5[%c0_2, %c0_3] : memref<128x256xbf16, #tpu.memory_space<vmem>>, vector<128x256xbf16>
    %cst = arith.constant dense<0.000000e+00> : vector<64x256xf32>
    %5 = tpu.matmul %3, %4, %cst {dimension_numbers = #tpu.dot_dimension_numbers<[1], [0], [0], [1], [0, 0, 1, 1], [], []>} : vector<64x128xbf16>, vector<128x256xbf16>, vector<64x256xf32> -> vector<64x256xf32>
    %c0_4 = arith.constant 0 : index
    %c0_5 = arith.constant 0 : index
    %6 = vector.load %arg6[%c0_4, %c0_5] : memref<1x256xf32, #tpu.memory_space<vmem>>, vector<1x256xf32>
    %7 = vector.broadcast %6 : vector<1x256xf32> to vector<64x256xf32>
    %8 = arith.addf %5, %7 : vector<64x256xf32>
    %9 = arith.negf %8 : vector<64x256xf32>
    %10 = math.exp %9 : vector<64x256xf32>
    %cst_6 = arith.constant 1.000000e+00 : f32
    %11 = vector.broadcast %cst_6 : f32 to vector<64x256xf32>
    %12 = arith.addf %11, %10 : vector<64x256xf32>
    %13 = arith.divf %11, %12 : vector<64x256xf32>
    %14 = arith.mulf %8, %13 : vector<64x256xf32>
    %c0_7 = arith.constant 0 : index
    %c0_8 = arith.constant 0 : index
    %15 = vector.load %arg11[%c0_7, %c0_8] : memref<64x128xf32, #tpu.memory_space<vmem>>, vector<64x128xf32>
    %16 = arith.truncf %14 : vector<64x256xf32> to vector<64x256xbf16>
    %c0_9 = arith.constant 0 : index
    %c0_10 = arith.constant 0 : index
    %17 = vector.load %arg7[%c0_9, %c0_10] : memref<256x128xbf16, #tpu.memory_space<vmem>>, vector<256x128xbf16>
    %cst_11 = arith.constant dense<0.000000e+00> : vector<64x128xf32>
    %18 = tpu.matmul %16, %17, %cst_11 {dimension_numbers = #tpu.dot_dimension_numbers<[1], [0], [0], [1], [0, 0, 1, 1], [], []>} : vector<64x256xbf16>, vector<256x128xbf16>, vector<64x128xf32> -> vector<64x128xf32>
    %19 = arith.addf %15, %18 : vector<64x128xf32>
    %c0_12 = arith.constant 0 : index
    %c0_13 = arith.constant 0 : index
    %20 = vector.load %arg11[%c0_12, %c0_13] : memref<64x128xf32, #tpu.memory_space<vmem>>, vector<64x128xf32>
    tpu.vector_store %arg11[%c0_12, %c0_13], %19 {strides = array<i32>} : memref<64x128xf32, #tpu.memory_space<vmem>>, vector<64x128xf32>,
    %c1_i32 = arith.constant 1 : i32
    %21 = arith.cmpi eq, %arg1, %c1_i32 : i32
    %22 = arith.extui %21 : i1 to i32
    %c0_i32_14 = arith.constant 0 : i32
    %23 = arith.cmpi ne, %22, %c0_i32_14 : i32
    scf.if %23 {
      %c0_15 = arith.constant 0 : index
      %c0_16 = arith.constant 0 : index
      %24 = vector.load %arg11[%c0_15, %c0_16] : memref<64x128xf32, #tpu.memory_space<vmem>>, vector<64x128xf32>
      %c0_17 = arith.constant 0 : index
      %c0_18 = arith.constant 0 : index
      %25 = vector.load %arg8[%c0_17, %c0_18] : memref<1x128xf32, #tpu.memory_space<vmem>>, vector<1x128xf32>
      %26 = vector.broadcast %25 : vector<1x128xf32> to vector<64x128xf32>
      %27 = arith.addf %24, %26 : vector<64x128xf32>
      %c0_19 = arith.constant 0 : index
      %c0_20 = arith.constant 0 : index
      %28 = vector.load %arg9[%c0_19, %c0_20] : memref<64x128xf32, #tpu.memory_space<vmem>>, vector<64x128xf32>
      tpu.vector_store %arg9[%c0_19, %c0_20], %27 {strides = array<i32>} : memref<64x128xf32, #tpu.memory_space<vmem>>, vector<64x128xf32>,
    } else {
    }
    return
  }
  func.func @transform_0(%arg0: i32, %arg1: i32) -> (i32, i32) {
    %c0_i32 = arith.constant 0 : i32
    %c0_i32_0 = arith.constant 0 : i32
    return %arg0, %c0_i32 : i32, i32
  }
  func.func @transform_1(%arg0: i32, %arg1: i32) -> (i32, i32) {
    %c0_i32 = arith.constant 0 : i32
    %c0_i32_0 = arith.constant 0 : i32
    %c0_i32_1 = arith.constant 0 : i32
    return %c0_i32, %c0_i32_0 : i32, i32
  }
  func.func @transform_2(%arg0: i32, %arg1: i32) -> (i32, i32) {
    %c0_i32 = arith.constant 0 : i32
    %c0_i32_0 = arith.constant 0 : i32
    %c0_i32_1 = arith.constant 0 : i32
    return %c0_i32, %c0_i32_0 : i32, i32
  }
  func.func @transform_3(%arg0: i32, %arg1: i32) -> (i32, i32) {
    %c0_i32 = arith.constant 0 : i32
    %c0_i32_0 = arith.constant 0 : i32
    return %c0_i32, %arg1 : i32, i32
  }
  func.func @transform_4(%arg0: i32, %arg1: i32) -> (i32, i32) {
    %c0_i32 = arith.constant 0 : i32
    %c0_i32_0 = arith.constant 0 : i32
    return %c0_i32, %arg1 : i32, i32
  }
  func.func @transform_5(%arg0: i32, %arg1: i32) -> (i32, i32) {
    %c0_i32 = arith.constant 0 : i32
    %c0_i32_0 = arith.constant 0 : i32
    return %arg1, %c0_i32 : i32, i32
  }
  func.func @transform_6(%arg0: i32, %arg1: i32) -> (i32, i32) {
    %c0_i32 = arith.constant 0 : i32
    %c0_i32_0 = arith.constant 0 : i32
    %c0_i32_1 = arith.constant 0 : i32
    return %c0_i32, %c0_i32_0 : i32, i32
  }
  func.func @transform_7(%arg0: i32, %arg1: i32) -> (i32, i32) {
    %c0_i32 = arith.constant 0 : i32
    %c0_i32_0 = arith.constant 0 : i32
    return %arg0, %c0_i32 : i32, i32
  }
}

</mosaic_0001>

<llo_original>
// kernel: feedforward.1
$region0: #{feedforward.1}
  #allocation0 [shape = 'u32[]', space=smem, size = 0x4, offset = 0x4, fixed_abs, tag = 'smem constant byte address 0x4 - core index']
  #allocation1 [shape = 'u32[144,128]{1,0:T(1,128)}', space=vmem, size = 0x12000, scoped, tag = 'internal scratch']
  #allocation2 [shape = 'bf16[64,128]{1,0:T(8,128)(2,1)}', space=vmem, size = 0x4000, scoped, tag = 'scratch operand']
  #allocation3 [shape = 'f32[64,128]{1,0:T(8,128)}', space=vmem, size = 0x8000, scoped, tag = 'scratch operand']
  %s0 = inlined_call_operand.vmem [shape: f32[128,128], index: 0, kind: input, shape index: {}]
  %s1 = inlined_call_operand.vmem [shape: f32[1,128], index: 1, kind: input, shape index: {}]
  %s2 = inlined_call_operand.vmem [shape: f32[1,128], index: 2, kind: input, shape index: {}]
  %s3 = inlined_call_operand.vmem [shape: bf16[128,512], index: 3, kind: input, shape index: {}]
  %s4 = inlined_call_operand.vmem [shape: f32[1,512], index: 4, kind: input, shape index: {}]
  %s5 = inlined_call_operand.vmem [shape: bf16[512,128], index: 5, kind: input, shape index: {}]
  %s6 = inlined_call_operand.vmem [shape: f32[1,128], index: 6, kind: input, shape index: {}]
  %s7 = inlined_call_operand.hbm [shape: f32[128,128], index: 7, kind: output, shape index: {}]
  %s8 = sld [smem:[#allocation0]]
  $region107: #{feedforward.1} parent=0
    _
  %s10 = ssub.s32 1, %s8
  %s11 = scalar_select 0, %s10, %s8
  $region1: #{feedforward.1} parent=0
    #allocation4 [shape = 'u8[131072]{0}', space=vmem, size = 0x20000, scoped, tag = 'input window, operand 3']
    #allocation5 [shape = 'u8[65536]{0}', space=vmem, size = 0x10000, scoped, tag = 'output window, operand 0']
    #allocation6 [shape = 's32[2]{0}', space=sflag, size = 0x8, scoped, tag = 'scoped memory for feedforward.1']
    %12 = vsyncpa [#allocation6], 0
    %s13 = scalar_lea.sflag [#allocation6], 1
    %14 = vsyncpa %s13, 0
    loop: start=0, step=1, limit=6
    $region2: #{feedforward.1} parent=1 // loop_pre_header
      _
    $region3: #{feedforward.1} parent=1 // loop_header
      %s16 = sphi 0, %s20
      %p17 = scmp.ge.s32.totalorder %s16, 6
      %s23 = sphi 0, %s35
      %s24 = sphi 0, %s31
      %s25 = sphi 0, %s23
      %s26 = sphi 0, %s24
      %s27 = sphi 0, %s25
      %s28 = sphi 0, %s26
      %s38 = sphi 0, %s40
      %s41 = sphi 0, %s38
      %s42 = sphi 0, %s41
      %s58 = sphi 0, %s42
      %s62 = sphi 0, %s62
      %s64 = sphi 0, %s62
      %s65 = sphi 0, %s64
      %s79 = sphi 0, %s65
      %s83 = sphi 0, %s83
      %s85 = sphi 0, %s83
      %s86 = sphi 0, %s85
      %s100 = sphi 0, %s86
      %s106 = sphi 0, %s108
      %s109 = sphi 0, %s106
      %s110 = sphi 0, %s109
      %s126 = sphi 0, %s110
      %s132 = sphi 0, %s134
      %s135 = sphi 0, %s132
      %s136 = sphi 0, %s135
      %s152 = sphi 0, %s136
      %s158 = sphi 0, %s160
      %s161 = sphi 0, %s158
      %s162 = sphi 0, %s161
      %s178 = sphi 0, %s162
      %s182 = sphi 0, %s182
      %s184 = sphi 0, %s182
      %s185 = sphi 0, %s184
      %s199 = sphi 0, %s185
      %s205 = sphi 0, %s207
      %s208 = sphi 0, %s205
      %s209 = sphi 0, %s208
      %s225 = sphi 0, %s209
    $region4: #{feedforward.1} parent=1 // loop_header_branch
      %19 = sbr.rel (%p17) target = $region8
    $region5: #{feedforward.1} parent=1 // loop_body
      %s21 = ssub.s32 %s16, 1
      %s22 = ssub.s32 %s16, 2
      %s29 = sadd.s32 1, %s24
      %p30 = scmp.ge.s32.totalorder %s29, 2
      %s31 = scalar_select %p30, 0, %s29
      %s32 = sadd.s32 1, %s23
      %s33 = scalar_select %p30, %s32, %s23
      %p34 = scmp.ge.s32.totalorder %s33, 2
      %s35 = scalar_select %p34, 0, %s33
      %s36 = ssub.s32 %s23, %s35
      %p37 = scmp.eq.s32.totalorder %s36, 0
      %s39 = sadd.s32 %s38, 1
      %s40 = scalar_select %p37, %s38, %s39
      %p43 = pneg %p37
      %p44 = scmp.eq.s32.totalorder %s16, 3
      %p45 = por %p43, %p44
      %p46 = scmp.ne.s32.totalorder %s38, %s41
      %p47 = scmp.eq.s32.totalorder %s16, 0
      %p48 = por %p46, %p47
      %p49 = scmp.ne.s32.totalorder %s38, %s41
      %p50 = scmp.eq.s32.totalorder %s21, 3
      %p51 = por %p49, %p50
      %p52 = scmp.ne.s32.totalorder %s41, %s42
      %p53 = scmp.eq.s32.totalorder %s21, 0
      %p54 = por %p52, %p53
      %p55 = scmp.ne.s32.totalorder %s41, %s42
      %p56 = scmp.eq.s32.totalorder %s22, 3
      %p57 = por %p55, %p56
      %p59 = scmp.ne.s32.totalorder %s42, %s58
      %p60 = scmp.eq.s32.totalorder %s22, 0
      %p61 = por %p59, %p60
      %s63 = sadd.s32 %s62, 1
      %p66 = scmp.eq.s32.totalorder %s16, 3
      %p67 = scmp.ne.s32.totalorder %s62, %s64
      %p68 = scmp.eq.s32.totalorder %s16, 0
      %p69 = por %p67, %p68
      %p70 = scmp.ne.s32.totalorder %s62, %s64
      %p71 = scmp.eq.s32.totalorder %s21, 3
      %p72 = por %p70, %p71
      %p73 = scmp.ne.s32.totalorder %s64, %s65
      %p74 = scmp.eq.s32.totalorder %s21, 0
      %p75 = por %p73, %p74
      %p76 = scmp.ne.s32.totalorder %s64, %s65
      %p77 = scmp.eq.s32.totalorder %s22, 3
      %p78 = por %p76, %p77
      %p80 = scmp.ne.s32.totalorder %s65, %s79
      %p81 = scmp.eq.s32.totalorder %s22, 0
      %p82 = por %p80, %p81
      %s84 = sadd.s32 %s83, 1
      %p87 = scmp.eq.s32.totalorder %s16, 3
      %p88 = scmp.ne.s32.totalorder %s83, %s85
      %p89 = scmp.eq.s32.totalorder %s16, 0
      %p90 = por %p88, %p89
      %p91 = scmp.ne.s32.totalorder %s83, %s85
      %p92 = scmp.eq.s32.totalorder %s21, 3
      %p93 = por %p91, %p92
      %p94 = scmp.ne.s32.totalorder %s85, %s86
      %p95 = scmp.eq.s32.totalorder %s21, 0
      %p96 = por %p94, %p95
      %p97 = scmp.ne.s32.totalorder %s85, %s86
      %p98 = scmp.eq.s32.totalorder %s22, 3
      %p99 = por %p97, %p98
      %p101 = scmp.ne.s32.totalorder %s86, %s100
      %p102 = scmp.eq.s32.totalorder %s22, 0
      %p103 = por %p101, %p102
      %s104 = ssub.s32 %s24, %s31
      %p105 = scmp.eq.s32.totalorder %s104, 0
      %s107 = sadd.s32 %s106, 1
      %s108 = scalar_select %p105, %s106, %s107
      %p111 = pneg %p105
      %p112 = scmp.eq.s32.totalorder %s16, 3
      %p113 = por %p111, %p112
      %p114 = scmp.ne.s32.totalorder %s106, %s109
      %p115 = scmp.eq.s32.totalorder %s16, 0
      %p116 = por %p114, %p115
      %p117 = scmp.ne.s32.totalorder %s106, %s109
      %p118 = scmp.eq.s32.totalorder %s21, 3
      %p119 = por %p117, %p118
      %p120 = scmp.ne.s32.totalorder %s109, %s110
      %p121 = scmp.eq.s32.totalorder %s21, 0
      %p122 = por %p120, %p121
      %p123 = scmp.ne.s32.totalorder %s109, %s110
      %p124 = scmp.eq.s32.totalorder %s22, 3
      %p125 = por %p123, %p124
      %p127 = scmp.ne.s32.totalorder %s110, %s126
      %p128 = scmp.eq.s32.totalorder %s22, 0
      %p129 = por %p127, %p128
      %s130 = ssub.s32 %s24, %s31
      %p131 = scmp.eq.s32.totalorder %s130, 0
      %s133 = sadd.s32 %s132, 1
      %s134 = scalar_select %p131, %s132, %s133
      %p137 = pneg %p131
      %p138 = scmp.eq.s32.totalorder %s16, 3
      %p139 = por %p137, %p138
      %p140 = scmp.ne.s32.totalorder %s132, %s135
      %p141 = scmp.eq.s32.totalorder %s16, 0
      %p142 = por %p140, %p141
      %p143 = scmp.ne.s32.totalorder %s132, %s135
      %p144 = scmp.eq.s32.totalorder %s21, 3
      %p145 = por %p143, %p144
      %p146 = scmp.ne.s32.totalorder %s135, %s136
      %p147 = scmp.eq.s32.totalorder %s21, 0
      %p148 = por %p146, %p147
      %p149 = scmp.ne.s32.totalorder %s135, %s136
      %p150 = scmp.eq.s32.totalorder %s22, 3
      %p151 = por %p149, %p150
      %p153 = scmp.ne.s32.totalorder %s136, %s152
      %p154 = scmp.eq.s32.totalorder %s22, 0
      %p155 = por %p153, %p154
      %s156 = ssub.s32 %s24, %s31
      %p157 = scmp.eq.s32.totalorder %s156, 0
      %s159 = sadd.s32 %s158, 1
      %s160 = scalar_select %p157, %s158, %s159
      %p163 = pneg %p157
      %p164 = scmp.eq.s32.totalorder %s16, 3
      %p165 = por %p163, %p164
      %p166 = scmp.ne.s32.totalorder %s158, %s161
      %p167 = scmp.eq.s32.totalorder %s16, 0
      %p168 = por %p166, %p167
      %p169 = scmp.ne.s32.totalorder %s158, %s161
      %p170 = scmp.eq.s32.totalorder %s21, 3
      %p171 = por %p169, %p170
      %p172 = scmp.ne.s32.totalorder %s161, %s162
      %p173 = scmp.eq.s32.totalorder %s21, 0
      %p174 = por %p172, %p173
      %p175 = scmp.ne.s32.totalorder %s161, %s162
      %p176 = scmp.eq.s32.totalorder %s22, 3
      %p177 = por %p175, %p176
      %p179 = scmp.ne.s32.totalorder %s162, %s178
      %p180 = scmp.eq.s32.totalorder %s22, 0
      %p181 = por %p179, %p180
      %s183 = sadd.s32 %s182, 1
      %p186 = scmp.eq.s32.totalorder %s16, 3
      %p187 = scmp.ne.s32.totalorder %s182, %s184
      %p188 = scmp.eq.s32.totalorder %s16, 0
      %p189 = por %p187, %p188
      %p190 = scmp.ne.s32.totalorder %s182, %s184
      %p191 = scmp.eq.s32.totalorder %s21, 3
      %p192 = por %p190, %p191
      %p193 = scmp.ne.s32.totalorder %s184, %s185
      %p194 = scmp.eq.s32.totalorder %s21, 0
      %p195 = por %p193, %p194
      %p196 = scmp.ne.s32.totalorder %s184, %s185
      %p197 = scmp.eq.s32.totalorder %s22, 3
      %p198 = por %p196, %p197
      %p200 = scmp.ne.s32.totalorder %s185, %s199
      %p201 = scmp.eq.s32.totalorder %s22, 0
      %p202 = por %p200, %p201
      %s203 = ssub.s32 %s23, %s35
      %p204 = scmp.eq.s32.totalorder %s203, 0
      %s206 = sadd.s32 %s205, 1
      %s207 = scalar_select %p204, %s205, %s206
      %p210 = pneg %p204
      %p211 = scmp.eq.s32.totalorder %s16, 3
      %p212 = por %p210, %p211
      %p213 = scmp.ne.s32.totalorder %s205, %s208
      %p214 = scmp.eq.s32.totalorder %s16, 0
      %p215 = por %p213, %p214
      %p216 = scmp.ne.s32.totalorder %s205, %s208
      %p217 = scmp.eq.s32.totalorder %s21, 3
      %p218 = por %p216, %p217
      %p219 = scmp.ne.s32.totalorder %s208, %s209
      %p220 = scmp.eq.s32.totalorder %s21, 0
      %p221 = por %p219, %p220
      %p222 = scmp.ne.s32.totalorder %s208, %s209
      %p223 = scmp.eq.s32.totalorder %s22, 3
      %p224 = por %p222, %p223
      %p226 = scmp.ne.s32.totalorder %s209, %s225
      %p227 = scmp.eq.s32.totalorder %s22, 0
      %p228 = por %p226, %p227
      %p229 = scmp.le.s32.totalorder 1, %s16
      %p230 = scmp.lt.s32.totalorder %s16, 5
      %p231 = pnand %p229, %p230
      %p232 = pneg %p231
      // Predicated region
      $region9: #{feedforward.1} parent=5 // pred_check
        _
      $region10: #{feedforward.1} parent=5 // pred_check_branch
        %234 = sbr.rel (%p231) target = $region12
      $region11: #{feedforward.1} parent=5 // pred_region
        %s235 = ssub.s32 %s16, 1
        // Predicated region
        $region13: #{feedforward.1} parent=11 // pred_check
          %p236 = pneg %p75
        $region14: #{feedforward.1} parent=11 // pred_check_branch
          %238 = sbr.rel (%p236) target = $region16
        $region15: #{feedforward.1} parent=11 // pred_region
          _
        $region16: #{feedforward.1} parent=11 // pred_fallthru
          _
        // Predicated region
        $region17: #{feedforward.1} parent=11 // pred_check
          %p239 = pneg %p96
        $region18: #{feedforward.1} parent=11 // pred_check_branch
          %241 = sbr.rel (%p239) target = $region20
        $region19: #{feedforward.1} parent=11 // pred_region
          _
        $region20: #{feedforward.1} parent=11 // pred_fallthru
          _
        // Predicated region
        $region21: #{feedforward.1} parent=11 // pred_check
          %p242 = pneg %p195
        $region22: #{feedforward.1} parent=11 // pred_check_branch
          %244 = sbr.rel (%p242) target = $region24
        $region23: #{feedforward.1} parent=11 // pred_region
          _
        $region24: #{feedforward.1} parent=11 // pred_fallthru
          _
      $region12: #{feedforward.1} parent=5 // pred_fallthru
        _
      %p245 = scmp.lt.s32.totalorder %s16, 4
      // Predicated region
      $region25: #{feedforward.1} parent=5 // pred_check
        %p246 = pneg %p245
      $region26: #{feedforward.1} parent=5 // pred_check_branch
        %248 = sbr.rel (%p246) target = $region28
      $region27: #{feedforward.1} parent=5 // pred_region
        // Predicated region
        $region29: #{feedforward.1} parent=27 // pred_check
          %p249 = pneg %p48
        $region30: #{feedforward.1} parent=27 // pred_check_branch
          %251 = sbr.rel (%p249) target = $region32
        $region31: #{feedforward.1} parent=27 // pred_region
          %s252 = smul.u32 8, %s23
          %p253 = scmp.lt.s32.totalorder %s252, 15
          %s254 = scalar_select %p253, %s252, 15
          %s255 = smul.addr %s254, 8
          %s256 = scalar_lea.vmem %s0, %s255
          %s257 = smul.u32 8, %s23
        $region32: #{feedforward.1} parent=27 // pred_fallthru
          _
        // Predicated region
        $region33: #{feedforward.1} parent=27 // pred_check
          %p258 = pneg %p116
        $region34: #{feedforward.1} parent=27 // pred_check_branch
          %260 = sbr.rel (%p258) target = $region36
        $region35: #{feedforward.1} parent=27 // pred_region
          %s261 = sand.u32 %s106, 1
          %s262 = sand.u32 %s106, 1
          %s263 = smul.addr %s262, 128
          %s264 = scalar_lea.vmem [#allocation4], %s263
          %s265 = smul.u32 2, %s24
          %s266 = smul.addr %s265, 4
          %s267 = scalar_lea.vmem %s3, %s266
          // Predicated region
          $region37: #{feedforward.1} parent=35 // pred_check
            _
          $region38: #{feedforward.1} parent=35 // pred_check_branch
            %269 = sbr.rel (0) target = $region40
          $region39: #{feedforward.1} parent=35 // pred_region
            // Predicated region
            $region41: #{feedforward.1} parent=39 // pred_check
              _
            $region42: #{feedforward.1} parent=39 // pred_check_branch
              %271 = sbr.rel (0) target = $region44
            $region43: #{feedforward.1} parent=39 // pred_region
              // Predicated region
              $region56: #{feedforward.1} parent=43 // pred_check
                _
              $region57: #{feedforward.1} parent=43 // pred_check_branch
                %317 = sbr.rel (0) target = $region59
              $region58: #{feedforward.1} parent=43 // pred_region
                loop: start=0, step=1, limit=1
                $region60: #{feedforward.1} parent=58 // loop_pre_header
                  _
                $region61: #{feedforward.1} parent=58 // loop_header
                  %s319 = sphi 0, %s323
                  %p320 = scmp.ge.s32.totalorder %s319, 1
                  %s324 = sphi %s267, %s267
                  %s325 = sphi %s264, %s264
                $region62: #{feedforward.1} parent=58 // loop_header_branch
                  %322 = sbr.rel (%p320) target = $region66
                $region63: #{feedforward.1} parent=58 // loop_body
                  %v326 = vld [vmem:[%s324] sm:$0xff]
                  %327 = vst [vmem:[%s325] sm:$0xff] %v326
                  %v328 = vld [vmem:[%s324 + $0x10] sm:$0xff]
                  %329 = vst [vmem:[%s325 + $0x8] sm:$0xff] %v328
                  %v330 = vld [vmem:[%s324 + $0x20] sm:$0xff]
                  %331 = vst [vmem:[%s325 + $0x10] sm:$0xff] %v330
                  %v332 = vld [vmem:[%s324 + $0x30] sm:$0xff]
                  %333 = vst [vmem:[%s325 + $0x18] sm:$0xff] %v332
                  %v334 = vld [vmem:[%s324 + $0x40] sm:$0xff]
                  %335 = vst [vmem:[%s325 + $0x20] sm:$0xff] %v334
                  %v336 = vld [vmem:[%s324 + $0x50] sm:$0xff]
                  %337 = vst [vmem:[%s325 + $0x28] sm:$0xff] %v336
                  %v338 = vld [vmem:[%s324 + $0x60] sm:$0xff]
                  %339 = vst [vmem:[%s325 + $0x30] sm:$0xff] %v338
                  %v340 = vld [vmem:[%s324 + $0x70] sm:$0xff]
                  %341 = vst [vmem:[%s325 + $0x38] sm:$0xff] %v340
                  %v342 = vld [vmem:[%s324 + $0x80] sm:$0xff]
                  %343 = vst [vmem:[%s325 + $0x40] sm:$0xff] %v342
                  %v344 = vld [vmem:[%s324 + $0x90] sm:$0xff]
                  %345 = vst [vmem:[%s325 + $0x48] sm:$0xff] %v344
                  %v346 = vld [vmem:[%s324 + $0xa0] sm:$0xff]
                  %347 = vst [vmem:[%s325 + $0x50] sm:$0xff] %v346
                  %v348 = vld [vmem:[%s324 + $0xb0] sm:$0xff]
                  %349 = vst [vmem:[%s325 + $0x58] sm:$0xff] %v348
                  %v350 = vld [vmem:[%s324 + $0xc0] sm:$0xff]
                  %351 = vst [vmem:[%s325 + $0x60] sm:$0xff] %v350
                  %v352 = vld [vmem:[%s324 + $0xd0] sm:$0xff]
                  %353 = vst [vmem:[%s325 + $0x68] sm:$0xff] %v352
                  %v354 = vld [vmem:[%s324 + $0xe0] sm:$0xff]
                  %355 = vst [vmem:[%s325 + $0x70] sm:$0xff] %v354
                  %v356 = vld [vmem:[%s324 + $0xf0] sm:$0xff]
                  %357 = vst [vmem:[%s325 + $0x78] sm:$0xff] %v356
                $region64: #{feedforward.1} parent=58 // loop_footer
                  %s323 = sadd.s32 1, %s319
                $region65: #{feedforward.1} parent=58 // loop_footer_branch
                  %318 = sbr.rel target = $region61
                $region66: #{feedforward.1} parent=58 // loop_exit
                  _
              $region59: #{feedforward.1} parent=43 // pred_fallthru
                _
              // Predicated region
              $region67: #{feedforward.1} parent=43 // pred_check
                _
              $region68: #{feedforward.1} parent=43 // pred_check_branch
                %359 = sbr.rel target = $region70
              $region69: #{feedforward.1} parent=43 // pred_region
                _
              $region70: #{feedforward.1} parent=43 // pred_fallthru
                _
            $region44: #{feedforward.1} parent=39 // pred_fallthru
              _
            // Predicated region
            $region45: #{feedforward.1} parent=39 // pred_check
              _
            $region46: #{feedforward.1} parent=39 // pred_check_branch
              %273 = sbr.rel target = $region48
            $region47: #{feedforward.1} parent=39 // pred_region
              %s275 = ssub.s32 256, 1
              loop: start=0, step=1, limit=1
              $region49: #{feedforward.1} parent=47 // loop_pre_header
                _
              $region50: #{feedforward.1} parent=47 // loop_header
                %s277 = sphi 0, %s281
                %p278 = scmp.ge.s32.totalorder %s277, 1
                %s282 = sphi %s267, %s267
                %s283 = sphi %s264, %s264
              $region51: #{feedforward.1} parent=47 // loop_header_branch
                %280 = sbr.rel (%p278) target = $region55
              $region52: #{feedforward.1} parent=47 // loop_body
                %v284 = vld [vmem:[%s282] sm:%s275]
                %285 = vst [vmem:[%s283] sm:%s275] %v284
                %v286 = vld [vmem:[%s282 + $0x10] sm:%s275]
                %287 = vst [vmem:[%s283 + $0x8] sm:%s275] %v286
                %v288 = vld [vmem:[%s282 + $0x20] sm:%s275]
                %289 = vst [vmem:[%s283 + $0x10] sm:%s275] %v288
                %v290 = vld [vmem:[%s282 + $0x30] sm:%s275]
                %291 = vst [vmem:[%s283 + $0x18] sm:%s275] %v290
                %v292 = vld [vmem:[%s282 + $0x40] sm:%s275]
                %293 = vst [vmem:[%s283 + $0x20] sm:%s275] %v292
                %v294 = vld [vmem:[%s282 + $0x50] sm:%s275]
                %295 = vst [vmem:[%s283 + $0x28] sm:%s275] %v294
                %v296 = vld [vmem:[%s282 + $0x60] sm:%s275]
                %297 = vst [vmem:[%s283 + $0x30] sm:%s275] %v296
                %v298 = vld [vmem:[%s282 + $0x70] sm:%s275]
                %299 = vst [vmem:[%s283 + $0x38] sm:%s275] %v298
                %v300 = vld [vmem:[%s282 + $0x80] sm:%s275]
                %301 = vst [vmem:[%s283 + $0x40] sm:%s275] %v300
                %v302 = vld [vmem:[%s282 + $0x90] sm:%s275]
                %303 = vst [vmem:[%s283 + $0x48] sm:%s275] %v302
                %v304 = vld [vmem:[%s282 + $0xa0] sm:%s275]
                %305 = vst [vmem:[%s283 + $0x50] sm:%s275] %v304
                %v306 = vld [vmem:[%s282 + $0xb0] sm:%s275]
                %307 = vst [vmem:[%s283 + $0x58] sm:%s275] %v306
                %v308 = vld [vmem:[%s282 + $0xc0] sm:%s275]
                %309 = vst [vmem:[%s283 + $0x60] sm:%s275] %v308
                %v310 = vld [vmem:[%s282 + $0xd0] sm:%s275]
                %311 = vst [vmem:[%s283 + $0x68] sm:%s275] %v310
                %v312 = vld [vmem:[%s282 + $0xe0] sm:%s275]
                %313 = vst [vmem:[%s283 + $0x70] sm:%s275] %v312
                %v314 = vld [vmem:[%s282 + $0xf0] sm:%s275]
                %315 = vst [vmem:[%s283 + $0x78] sm:%s275] %v314
              $region53: #{feedforward.1} parent=47 // loop_footer
                %s281 = sadd.s32 1, %s277
              $region54: #{feedforward.1} parent=47 // loop_footer_branch
                %276 = sbr.rel target = $region50
              $region55: #{feedforward.1} parent=47 // loop_exit
                _
            $region48: #{feedforward.1} parent=39 // pred_fallthru
              _
          $region40: #{feedforward.1} parent=35 // pred_fallthru
            _
          %360 = vnop
        $region36: #{feedforward.1} parent=27 // pred_fallthru
          _
        // Predicated region
        $region71: #{feedforward.1} parent=27 // pred_check
          %p361 = pneg %p142
        $region72: #{feedforward.1} parent=27 // pred_check_branch
          %363 = sbr.rel (%p361) target = $region74
        $region73: #{feedforward.1} parent=27 // pred_region
          %s364 = smul.u32 2, %s24
          %p365 = scmp.lt.s32.totalorder %s364, 3
          %s366 = scalar_select %p365, %s364, 3
          %s367 = scalar_lea.vmem %s4, %s366
          %s368 = smul.u32 2, %s24
        $region74: #{feedforward.1} parent=27 // pred_fallthru
          _
        // Predicated region
        $region75: #{feedforward.1} parent=27 // pred_check
          %p369 = pneg %p168
        $region76: #{feedforward.1} parent=27 // pred_check_branch
          %371 = sbr.rel (%p369) target = $region78
        $region77: #{feedforward.1} parent=27 // pred_region
          %s372 = smul.u32 32, %s24
          %p373 = scmp.lt.s32.totalorder %s372, 63
          %s374 = scalar_select %p373, %s372, 63
          %s375 = smul.addr %s374, 4
          %s376 = scalar_lea.vmem %s5, %s375
          %s377 = smul.u32 32, %s24
        $region78: #{feedforward.1} parent=27 // pred_fallthru
          _
      $region28: #{feedforward.1} parent=5 // pred_fallthru
        _
      %p378 = scmp.le.s32.totalorder 1, %s16
      %p379 = scmp.lt.s32.totalorder %s16, 5
      %p380 = pnand %p378, %p379
      %p381 = pneg %p380
      // Predicated region
      $region79: #{feedforward.1} parent=5 // pred_check
        _
      $region80: #{feedforward.1} parent=5 // pred_check_branch
        %383 = sbr.rel (%p380) target = $region82
      $region81: #{feedforward.1} parent=5 // pred_region
        %s384 = ssub.s32 %s16, 1
        %s385 = sand.u32 %s109, 1
        %s386 = sand.u32 %s109, 1
        %s387 = smul.addr %s386, 128
        %s388 = scalar_lea.vmem [#allocation4], %s387
        // Predicated region
        $region83: #{feedforward.1} parent=81 // pred_check
          %p389 = pneg %p122
        $region84: #{feedforward.1} parent=81 // pred_check_branch
          %391 = sbr.rel (%p389) target = $region86
        $region85: #{feedforward.1} parent=81 // pred_region
          _
        $region86: #{feedforward.1} parent=81 // pred_fallthru
          _
        %s392 = smul.u32 8, %s25
        %p393 = scmp.lt.s32.totalorder %s392, 15
        %s394 = scalar_select %p393, %s392, 15
        %s395 = smul.addr %s394, 8
        %s396 = scalar_lea.vmem %s0, %s395
        %p397 = pneg %p54
        %p398 = pneg %p51
        %p399 = pneg %p75
        %p400 = pneg %p72
        %p401 = pneg %p96
        %p402 = pneg %p93
        %s403 = sand.u32 %s109, 1
        %s404 = sand.u32 %s109, 1
        %s405 = smul.addr %s404, 128
        %s406 = scalar_lea.vmem [#allocation4], %s405
        %p407 = pneg %p122
        %p408 = pneg %p119
        %s409 = smul.u32 2, %s26
        %p410 = scmp.lt.s32.totalorder %s409, 3
        %s411 = scalar_select %p410, %s409, 3
        %s412 = scalar_lea.vmem %s4, %s411
        %p413 = pneg %p148
        %p414 = pneg %p145
        %s415 = smul.u32 32, %s26
        %p416 = scmp.lt.s32.totalorder %s415, 63
        %s417 = scalar_select %p416, %s415, 63
        %s418 = smul.addr %s417, 4
        %s419 = scalar_lea.vmem %s5, %s418
        %p420 = pneg %p174
        %p421 = pneg %p171
        %p422 = pneg %p195
        %p423 = pneg %p192
        %p424 = pneg %p221
        %p425 = pneg %p218
        %s426 = sand.u32 %s208, 1
        %s427 = scalar_lea.sflag [#allocation6], %s426
        %s428 = sand.u32 %s208, 1
        %s429 = smul.addr %s428, 64
        %s430 = scalar_lea.vmem [#allocation5], %s429
        %s431 = smul.u32 8, %s25
        %p432 = scmp.lt.s32.totalorder %s431, 15
        %s433 = scalar_select %p432, %s431, 15
        %s434 = smul.addr %s433, 8
        %s435 = scalar_lea.vmem %s0, %s434
        %s436 = smul.u32 8, %s25
        %s437 = smul.u32 2, %s26
        %s438 = smul.u32 2, %s26
        %p439 = scmp.lt.s32.totalorder %s438, 3
        %s440 = scalar_select %p439, %s438, 3
        %s441 = scalar_lea.vmem %s4, %s440
        %s442 = smul.u32 2, %s26
        %s443 = smul.u32 32, %s26
        %p444 = scmp.lt.s32.totalorder %s443, 63
        %s445 = scalar_select %p444, %s443, 63
        %s446 = smul.addr %s445, 4
        %s447 = scalar_lea.vmem %s5, %s446
        %s448 = smul.u32 32, %s26
        %s449 = smul.u32 8, %s25
        %p451 = scmp.eq.s32.totalorder %s26, 0
        // Predicated region
        $region87: #{feedforward.1} parent=81 // pred_check
          %p452 = pneg %p451
        $region88: #{feedforward.1} parent=81 // pred_check_branch
          %454 = sbr.rel (%p452) target = $region90
        $region89: #{feedforward.1} parent=81 // pred_region
          %v455 = vld [vmem:[%s435] sm:$0xff]
          %v456 = vld [vmem:[%s435 + $0x8] sm:$0xff]
          %v457 = vld [vmem:[%s435 + $0x10] sm:$0xff]
          %v458 = vld [vmem:[%s435 + $0x18] sm:$0xff]
          %v459 = vld [vmem:[%s435 + $0x20] sm:$0xff]
          %v460 = vld [vmem:[%s435 + $0x28] sm:$0xff]
          %v461 = vld [vmem:[%s435 + $0x30] sm:$0xff]
          %v462 = vld [vmem:[%s435 + $0x38] sm:$0xff]
          %463 = vadd.xlane.f32.xlu0 %v455
          %v464 = vpop.xlane.xlu0 %463
          %465 = vadd.xlane.f32.xlu0 %v456
          %v466 = vpop.xlane.xlu0 %465
          %467 = vadd.xlane.f32.xlu0 %v457
          %v468 = vpop.xlane.xlu0 %467
          %469 = vadd.xlane.f32.xlu0 %v458
          %v470 = vpop.xlane.xlu0 %469
          %471 = vadd.xlane.f32.xlu0 %v459
          %v472 = vpop.xlane.xlu0 %471
          %473 = vadd.xlane.f32.xlu0 %v460
          %v474 = vpop.xlane.xlu0 %473
          %475 = vadd.xlane.f32.xlu0 %v461
          %v476 = vpop.xlane.xlu0 %475
          %477 = vadd.xlane.f32.xlu0 %v462
          %v478 = vpop.xlane.xlu0 %477
          %v479 = vrcp.pop 128.0
          %v480 = vmul.f32 %v464, %v479
          %v481 = vmul.f32 %v466, %v479
          %v482 = vmul.f32 %v468, %v479
          %v483 = vmul.f32 %v470, %v479
          %v484 = vmul.f32 %v472, %v479
          %v485 = vmul.f32 %v474, %v479
          %v486 = vmul.f32 %v476, %v479
          %v487 = vmul.f32 %v478, %v479
          %v488 = vsub.f32 %v455, %v480
          %v489 = vsub.f32 %v456, %v481
          %v490 = vsub.f32 %v457, %v482
          %v491 = vsub.f32 %v458, %v483
          %v492 = vsub.f32 %v459, %v484
          %v493 = vsub.f32 %v460, %v485
          %v494 = vsub.f32 %v461, %v486
          %v495 = vsub.f32 %v462, %v487
          %v496 = vmul.f32 %v488, %v488
          %v497 = vmul.f32 %v489, %v489
          %v498 = vmul.f32 %v490, %v490
          %v499 = vmul.f32 %v491, %v491
          %v500 = vmul.f32 %v492, %v492
          %v501 = vmul.f32 %v493, %v493
          %v502 = vmul.f32 %v494, %v494
          %v503 = vmul.f32 %v495, %v495
          %504 = vadd.xlane.f32.xlu0 %v496
          %v505 = vpop.xlane.xlu0 %504
          %506 = vadd.xlane.f32.xlu0 %v497
          %v507 = vpop.xlane.xlu0 %506
          %508 = vadd.xlane.f32.xlu0 %v498
          %v509 = vpop.xlane.xlu0 %508
          %510 = vadd.xlane.f32.xlu0 %v499
          %v511 = vpop.xlane.xlu0 %510
          %512 = vadd.xlane.f32.xlu0 %v500
          %v513 = vpop.xlane.xlu0 %512
          %514 = vadd.xlane.f32.xlu0 %v501
          %v515 = vpop.xlane.xlu0 %514
          %516 = vadd.xlane.f32.xlu0 %v502
          %v517 = vpop.xlane.xlu0 %516
          %518 = vadd.xlane.f32.xlu0 %v503
          %v519 = vpop.xlane.xlu0 %518
          %v520 = vmul.f32 %v505, %v479
          %v521 = vmul.f32 %v507, %v479
          %v522 = vmul.f32 %v509, %v479
          %v523 = vmul.f32 %v511, %v479
          %v524 = vmul.f32 %v513, %v479
          %v525 = vmul.f32 %v515, %v479
          %v526 = vmul.f32 %v517, %v479
          %v527 = vmul.f32 %v519, %v479
          %v528 = vadd.f32 %v520, 1e-05
          %v529 = vadd.f32 %v521, 1e-05
          %v530 = vadd.f32 %v522, 1e-05
          %v531 = vadd.f32 %v523, 1e-05
          %v532 = vadd.f32 %v524, 1e-05
          %v533 = vadd.f32 %v525, 1e-05
          %v534 = vadd.f32 %v526, 1e-05
          %v535 = vadd.f32 %v527, 1e-05
          %v536 = vrsqrt.pop %v528
          %v537 = vrsqrt.pop %v529
          %v538 = vrsqrt.pop %v530
          %v539 = vrsqrt.pop %v531
          %v540 = vrsqrt.pop %v532
          %v541 = vrsqrt.pop %v533
          %v542 = vrsqrt.pop %v534
          %v543 = vrsqrt.pop %v535
          %v544 = vmul.f32 %v488, %v536
          %v545 = vmul.f32 %v489, %v537
          %v546 = vmul.f32 %v490, %v538
          %v547 = vmul.f32 %v491, %v539
          %v548 = vmul.f32 %v492, %v540
          %v549 = vmul.f32 %v493, %v541
          %v550 = vmul.f32 %v494, %v542
          %v551 = vmul.f32 %v495, %v543
          %v552 = vld [vmem:[%s1] sm:$0x1]
          %v554 = vlaneseq
          %v555 = vshrl.u32 %v554, 7
          %v556 = vsub.s32 0, %v555
          %v557 = vrot.slane %v552, %v556
          %v559 = vmul.f32 %v544, %v557
          %v560 = vmul.f32 %v545, %v557
          %v561 = vmul.f32 %v546, %v557
          %v562 = vmul.f32 %v547, %v557
          %v563 = vmul.f32 %v548, %v557
          %v564 = vmul.f32 %v549, %v557
          %v565 = vmul.f32 %v550, %v557
          %v566 = vmul.f32 %v551, %v557
          %v567 = vld [vmem:[%s2] sm:$0x1]
          %v569 = vlaneseq
          %v570 = vshrl.u32 %v569, 7
          %v571 = vsub.s32 0, %v570
          %v572 = vrot.slane %v567, %v571
          %v574 = vadd.f32 %v559, %v572
          %v575 = vadd.f32 %v560, %v572
          %v576 = vadd.f32 %v561, %v572
          %v577 = vadd.f32 %v562, %v572
          %v578 = vadd.f32 %v563, %v572
          %v579 = vadd.f32 %v564, %v572
          %v580 = vadd.f32 %v565, %v572
          %v581 = vadd.f32 %v566, %v572
          %v582 = vpack.c.bf16 %v575, %v574
          %v583 = vpack.c.bf16 %v577, %v576
          %v584 = vpack.c.bf16 %v579, %v578
          %v585 = vpack.c.bf16 %v581, %v580
          %v590 = vunpack.c.l.b16 %v582
          %v591 = vunpack.c.h.b16 %v582
          %v592 = vunpack.c.l.b16 %v583
          %v593 = vunpack.c.h.b16 %v583
          %v594 = vunpack.c.l.b16 %v584
          %v595 = vunpack.c.h.b16 %v584
          %v596 = vunpack.c.l.b16 %v585
          %v597 = vunpack.c.h.b16 %v585
          %v598 = vpack.c.b16 %v590, %v590
          %v599 = vpack.c.b16 %v591, %v591
          %v600 = vpack.c.b16 %v592, %v592
          %v601 = vpack.c.b16 %v593, %v593
          %v602 = vpack.c.b16 %v594, %v594
          %v603 = vpack.c.b16 %v595, %v595
          %v604 = vpack.c.b16 %v596, %v596
          %v605 = vpack.c.b16 %v597, %v597
          %614 = vst [vmem:[#allocation2] sm:$0xf] %v598
          %615 = vst [vmem:[#allocation2 + $0x4] sm:$0xf] %v599
          %616 = vst [vmem:[#allocation2 + $0x8] sm:$0xf] %v600
          %617 = vst [vmem:[#allocation2 + $0xc] sm:$0xf] %v601
          %618 = vst [vmem:[#allocation2 + $0x10] sm:$0xf] %v602
          %619 = vst [vmem:[#allocation2 + $0x14] sm:$0xf] %v603
          %620 = vst [vmem:[#allocation2 + $0x18] sm:$0xf] %v604
          %621 = vst [vmem:[#allocation2 + $0x1c] sm:$0xf] %v605
          %622 = vst [vmem:[#allocation3] sm:$0xff] 0.0
          %623 = vst [vmem:[#allocation3 + $0x8] sm:$0xff] 0.0
          %624 = vst [vmem:[#allocation3 + $0x10] sm:$0xff] 0.0
          %625 = vst [vmem:[#allocation3 + $0x18] sm:$0xff] 0.0
          %626 = vst [vmem:[#allocation3 + $0x20] sm:$0xff] 0.0
          %627 = vst [vmem:[#allocation3 + $0x28] sm:$0xff] 0.0
          %628 = vst [vmem:[#allocation3 + $0x30] sm:$0xff] 0.0
          %629 = vst [vmem:[#allocation3 + $0x38] sm:$0xff] 0.0
        $region90: #{feedforward.1} parent=81 // pred_fallthru
          _
        %v630 = vld [vmem:[#allocation2] sm:$0xf]
        %v631 = vld [vmem:[#allocation2 + $0x4] sm:$0xf]
        %v632 = vld [vmem:[#allocation2 + $0x8] sm:$0xf]
        %v633 = vld [vmem:[#allocation2 + $0xc] sm:$0xf]
        %v634 = vld [vmem:[#allocation2 + $0x10] sm:$0xf]
        %v635 = vld [vmem:[#allocation2 + $0x14] sm:$0xf]
        %v636 = vld [vmem:[#allocation2 + $0x18] sm:$0xf]
        %v637 = vld [vmem:[#allocation2 + $0x1c] sm:$0xf]
        %v638 = vld [vmem:[%s388] sm:$0xff]
        %v639 = vld [vmem:[%s388 + $0x8] sm:$0xff]
        %v640 = vld [vmem:[%s388 + $0x10] sm:$0xff]
        %v641 = vld [vmem:[%s388 + $0x18] sm:$0xff]
        %v642 = vld [vmem:[%s388 + $0x20] sm:$0xff]
        %v643 = vld [vmem:[%s388 + $0x28] sm:$0xff]
        %v644 = vld [vmem:[%s388 + $0x30] sm:$0xff]
        %v645 = vld [vmem:[%s388 + $0x38] sm:$0xff]
        %v646 = vld [vmem:[%s388 + $0x40] sm:$0xff]
        %v647 = vld [vmem:[%s388 + $0x48] sm:$0xff]
        %v648 = vld [vmem:[%s388 + $0x50] sm:$0xff]
        %v649 = vld [vmem:[%s388 + $0x58] sm:$0xff]
        %v650 = vld [vmem:[%s388 + $0x60] sm:$0xff]
        %v651 = vld [vmem:[%s388 + $0x68] sm:$0xff]
        %v652 = vld [vmem:[%s388 + $0x70] sm:$0xff]
        %v653 = vld [vmem:[%s388 + $0x78] sm:$0xff]
        %v654 = vld [vmem:[%s441] sm:$0x3]
        %v656 = vlaneseq
        %v657 = vshrl.u32 %v656, 7
        %v658 = vsub.s32 0, %v657
        %v659 = vrot.slane %v654, %v658
        %v660 = vlaneseq
        %v661 = vshrl.u32 %v660, 7
        %v662 = vsub.s32 1, %v661
        %v663 = vrot.slane %v654, %v662
        %v674 = vunpack.c.l.b16 %v630
        %v675 = vunpack.c.l.b16 %v631
        %v676 = vunpack.c.l.b16 %v632
        %v677 = vunpack.c.l.b16 %v633
        %v678 = vunpack.c.l.b16 %v634
        %v679 = vunpack.c.l.b16 %v635
        %v680 = vunpack.c.l.b16 %v636
        %v681 = vunpack.c.l.b16 %v637
        %v682 = vpack.c.b16 %v675, %v674
        %v683 = vpack.c.b16 %v677, %v676
        %v684 = vpack.c.b16 %v679, %v678
        %v685 = vpack.c.b16 %v681, %v680
        %v706 = vunpack.c.l.b16 %v638
        %v707 = vunpack.c.h.b16 %v638
        %v708 = vunpack.c.l.b16 %v639
        %v709 = vunpack.c.h.b16 %v639
        %v710 = vunpack.c.l.b16 %v640
        %v711 = vunpack.c.h.b16 %v640
        %v712 = vunpack.c.l.b16 %v641
        %v713 = vunpack.c.h.b16 %v641
        %v714 = vunpack.c.l.b16 %v642
        %v715 = vunpack.c.h.b16 %v642
        %v716 = vunpack.c.l.b16 %v643
        %v717 = vunpack.c.h.b16 %v643
        %v718 = vunpack.c.l.b16 %v644
        %v719 = vunpack.c.h.b16 %v644
        %v720 = vunpack.c.l.b16 %v645
        %v721 = vunpack.c.h.b16 %v645
        %v722 = vunpack.c.l.b16 %v646
        %v723 = vunpack.c.h.b16 %v646
        %v724 = vunpack.c.l.b16 %v647
        %v725 = vunpack.c.h.b16 %v647
        %v726 = vunpack.c.l.b16 %v648
        %v727 = vunpack.c.h.b16 %v648
        %v728 = vunpack.c.l.b16 %v649
        %v729 = vunpack.c.h.b16 %v649
        %v730 = vunpack.c.l.b16 %v650
        %v731 = vunpack.c.h.b16 %v650
        %v732 = vunpack.c.l.b16 %v651
        %v733 = vunpack.c.h.b16 %v651
        %v734 = vunpack.c.l.b16 %v652
        %v735 = vunpack.c.h.b16 %v652
        %v736 = vunpack.c.l.b16 %v653
        %v737 = vunpack.c.h.b16 %v653
        %v738 = vpack.c.b16 %v708, %v706
        %v739 = vpack.c.b16 %v709, %v707
        %v740 = vpack.c.b16 %v712, %v710
        %v741 = vpack.c.b16 %v713, %v711
        %v742 = vpack.c.b16 %v716, %v714
        %v743 = vpack.c.b16 %v717, %v715
        %v744 = vpack.c.b16 %v720, %v718
        %v745 = vpack.c.b16 %v721, %v719
        %v746 = vpack.c.b16 %v724, %v722
        %v747 = vpack.c.b16 %v725, %v723
        %v748 = vpack.c.b16 %v728, %v726
        %v749 = vpack.c.b16 %v729, %v727
        %v750 = vpack.c.b16 %v732, %v730
        %v751 = vpack.c.b16 %v733, %v731
        %v752 = vpack.c.b16 %v736, %v734
        %v753 = vpack.c.b16 %v737, %v735
        %770 = vmatprep.subr.bf16.mxu0 %v753
        %771 = vmatpush1.bf16.msra.mxu0 %v752
        %772 = vmatprep.subr.bf16.mxu0 %v751
        %773 = vmatpush1.bf16.msra.mxu0 %v750
        %774 = vmatprep.subr.bf16.mxu0 %v749
        %775 = vmatpush1.bf16.msra.mxu0 %v748
        %776 = vmatprep.subr.bf16.mxu0 %v747
        %777 = vmatpush1.bf16.msra.mxu0 %v746
        %778 = vmatprep.subr.bf16.mxu0 %v745
        %779 = vmatpush1.bf16.msra.mxu0 %v744
        %780 = vmatprep.subr.bf16.mxu0 %v743
        %781 = vmatpush1.bf16.msra.mxu0 %v742
        %782 = vmatprep.subr.bf16.mxu0 %v741
        %783 = vmatpush1.bf16.msra.mxu0 %v740
        %784 = vmatprep.subr.bf16.mxu0 %v739
        %785 = vmatpush1.bf16.msra.mxu0 %v738
        %786 = vmatprep.subr.bf16.mxu0 0
        %787 = vmatpush2.bf16.msra.mxu0 0
        %788 = vmatprep.subr.bf16.mxu0 0
        %789 = vmatpush2.bf16.msra.mxu0 0
        %790 = vmatprep.subr.bf16.mxu0 0
        %791 = vmatpush2.bf16.msra.mxu0 0
        %792 = vmatprep.subr.bf16.mxu0 0
        %793 = vmatpush2.bf16.msra.mxu0 0
        %794 = vmatprep.subr.bf16.mxu0 0
        %795 = vmatpush2.bf16.msra.mxu0 0
        %796 = vmatprep.subr.bf16.mxu0 0
        %797 = vmatpush2.bf16.msra.mxu0 0
        %798 = vmatprep.subr.bf16.mxu0 0
        %799 = vmatpush2.bf16.msra.mxu0 0
        %800 = vmatprep.subr.bf16.mxu0 0
        %801 = vmatpush2.bf16.msra.mxu0 0
        %802 = vmatprep.mubr.bf16.mxu0 0
        %803 = vmatmul.mubr.bf16.gmra.mxu0 %v682
        %v804 = vpop.f32.mrf.mxu0
        %v805 = vadd.f32 %v659, %v804
        %v806 = vpop.f32.mrf.mxu0
        %v807 = vadd.f32 %v663, %v806
        %v808 = vpop.f32.mrf.mxu0
        %v809 = vadd.f32 %v659, %v808
        %v810 = vpop.f32.mrf.mxu0
        %v811 = vadd.f32 %v663, %v810
        %812 = vmatprep.mubr.bf16.mxu0 0
        %813 = vmatmul.mubr.bf16.gmra.mxu0 %v683
        %v814 = vpop.f32.mrf.mxu0
        %v815 = vadd.f32 %v659, %v814
        %v816 = vpop.f32.mrf.mxu0
        %v817 = vadd.f32 %v663, %v816
        %v818 = vpop.f32.mrf.mxu0
        %v819 = vadd.f32 %v659, %v818
        %v820 = vpop.f32.mrf.mxu0
        %v821 = vadd.f32 %v663, %v820
        %822 = vmatprep.mubr.bf16.mxu0 0
        %823 = vmatmul.mubr.bf16.gmra.mxu0 %v684
        %v824 = vpop.f32.mrf.mxu0
        %v825 = vadd.f32 %v659, %v824
        %v826 = vpop.f32.mrf.mxu0
        %v827 = vadd.f32 %v663, %v826
        %v828 = vpop.f32.mrf.mxu0
        %v829 = vadd.f32 %v659, %v828
        %v830 = vpop.f32.mrf.mxu0
        %v831 = vadd.f32 %v663, %v830
        %832 = vmatprep.mubr.bf16.mxu0 0
        %833 = vmatmul.mubr.bf16.gmra.mxu0 %v685
        %v834 = vpop.f32.mrf.mxu0
        %v835 = vadd.f32 %v659, %v834
        %v836 = vpop.f32.mrf.mxu0
        %v837 = vadd.f32 %v663, %v836
        %v838 = vpop.f32.mrf.mxu0
        %v839 = vadd.f32 %v659, %v838
        %v840 = vpop.f32.mrf.mxu0
        %v841 = vadd.f32 %v663, %v840
        %842 = vdwg.mxu0
        %v843 = vxor.u32 %v805, 2147483648
        %v844 = vxor.u32 %v807, 2147483648
        %v845 = vxor.u32 %v809, 2147483648
        %v846 = vxor.u32 %v811, 2147483648
        %v847 = vxor.u32 %v815, 2147483648
        %v848 = vxor.u32 %v817, 2147483648
        %v849 = vxor.u32 %v819, 2147483648
        %v850 = vxor.u32 %v821, 2147483648
        %v851 = vxor.u32 %v825, 2147483648
        %v852 = vxor.u32 %v827, 2147483648
        %v853 = vxor.u32 %v829, 2147483648
        %v854 = vxor.u32 %v831, 2147483648
        %v855 = vxor.u32 %v835, 2147483648
        %v856 = vxor.u32 %v837, 2147483648
        %v857 = vxor.u32 %v839, 2147483648
        %v858 = vxor.u32 %v841, 2147483648
        %v859 = vmul.f32 %v843, 1.442695
        %v860 = vpow.pop %v859
        %v861 = vmul.f32 %v844, 1.442695
        %v862 = vpow.pop %v861
        %v863 = vmul.f32 %v845, 1.442695
        %v864 = vpow.pop %v863
        %v865 = vmul.f32 %v846, 1.442695
        %v866 = vpow.pop %v865
        %v867 = vmul.f32 %v847, 1.442695
        %v868 = vpow.pop %v867
        %v869 = vmul.f32 %v848, 1.442695
        %v870 = vpow.pop %v869
        %v871 = vmul.f32 %v849, 1.442695
        %v872 = vpow.pop %v871
        %v873 = vmul.f32 %v850, 1.442695
        %v874 = vpow.pop %v873
        %v875 = vmul.f32 %v851, 1.442695
        %v876 = vpow.pop %v875
        %v877 = vmul.f32 %v852, 1.442695
        %v878 = vpow.pop %v877
        %v879 = vmul.f32 %v853, 1.442695
        %v880 = vpow.pop %v879
        %v881 = vmul.f32 %v854, 1.442695
        %v882 = vpow.pop %v881
        %v883 = vmul.f32 %v855, 1.442695
        %v884 = vpow.pop %v883
        %v885 = vmul.f32 %v856, 1.442695
        %v886 = vpow.pop %v885
        %v887 = vmul.f32 %v857, 1.442695
        %v888 = vpow.pop %v887
        %v889 = vmul.f32 %v858, 1.442695
        %v890 = vpow.pop %v889
        %v891 = vadd.f32 %v860, 1.0
        %v892 = vadd.f32 %v862, 1.0
        %v893 = vadd.f32 %v864, 1.0
        %v894 = vadd.f32 %v866, 1.0
        %v895 = vadd.f32 %v868, 1.0
        %v896 = vadd.f32 %v870, 1.0
        %v897 = vadd.f32 %v872, 1.0
        %v898 = vadd.f32 %v874, 1.0
        %v899 = vadd.f32 %v876, 1.0
        %v900 = vadd.f32 %v878, 1.0
        %v901 = vadd.f32 %v880, 1.0
        %v902 = vadd.f32 %v882, 1.0
        %v903 = vadd.f32 %v884, 1.0
        %v904 = vadd.f32 %v886, 1.0
        %v905 = vadd.f32 %v888, 1.0
        %v906 = vadd.f32 %v890, 1.0
        %v907 = vrcp.pop %v891
        %v908 = vmul.f32 1.0, %v907
        %v909 = vrcp.pop %v892
        %v910 = vmul.f32 1.0, %v909
        %v911 = vrcp.pop %v893
        %v912 = vmul.f32 1.0, %v911
        %v913 = vrcp.pop %v894
        %v914 = vmul.f32 1.0, %v913
        %v915 = vrcp.pop %v895
        %v916 = vmul.f32 1.0, %v915
        %v917 = vrcp.pop %v896
        %v918 = vmul.f32 1.0, %v917
        %v919 = vrcp.pop %v897
        %v920 = vmul.f32 1.0, %v919
        %v921 = vrcp.pop %v898
        %v922 = vmul.f32 1.0, %v921
        %v923 = vrcp.pop %v899
        %v924 = vmul.f32 1.0, %v923
        %v925 = vrcp.pop %v900
        %v926 = vmul.f32 1.0, %v925
        %v927 = vrcp.pop %v901
        %v928 = vmul.f32 1.0, %v927
        %v929 = vrcp.pop %v902
        %v930 = vmul.f32 1.0, %v929
        %v931 = vrcp.pop %v903
        %v932 = vmul.f32 1.0, %v931
        %v933 = vrcp.pop %v904
        %v934 = vmul.f32 1.0, %v933
        %v935 = vrcp.pop %v905
        %v936 = vmul.f32 1.0, %v935
        %v937 = vrcp.pop %v906
        %v938 = vmul.f32 1.0, %v937
        %v939 = vmul.f32 %v805, %v908
        %v940 = vmul.f32 %v807, %v910
        %v941 = vmul.f32 %v809, %v912
        %v942 = vmul.f32 %v811, %v914
        %v943 = vmul.f32 %v815, %v916
        %v944 = vmul.f32 %v817, %v918
        %v945 = vmul.f32 %v819, %v920
        %v946 = vmul.f32 %v821, %v922
        %v947 = vmul.f32 %v825, %v924
        %v948 = vmul.f32 %v827, %v926
        %v949 = vmul.f32 %v829, %v928
        %v950 = vmul.f32 %v831, %v930
        %v951 = vmul.f32 %v835, %v932
        %v952 = vmul.f32 %v837, %v934
        %v953 = vmul.f32 %v839, %v936
        %v954 = vmul.f32 %v841, %v938
        %v955 = vld [vmem:[#allocation3] sm:$0xff]
        %v956 = vld [vmem:[#allocation3 + $0x8] sm:$0xff]
        %v957 = vld [vmem:[#allocation3 + $0x10] sm:$0xff]
        %v958 = vld [vmem:[#allocation3 + $0x18] sm:$0xff]
        %v959 = vld [vmem:[#allocation3 + $0x20] sm:$0xff]
        %v960 = vld [vmem:[#allocation3 + $0x28] sm:$0xff]
        %v961 = vld [vmem:[#allocation3 + $0x30] sm:$0xff]
        %v962 = vld [vmem:[#allocation3 + $0x38] sm:$0xff]
        %v963 = vpack.c.bf16 %v941, %v939
        %v964 = vpack.c.bf16 %v942, %v940
        %v965 = vpack.c.bf16 %v945, %v943
        %v966 = vpack.c.bf16 %v946, %v944
        %v967 = vpack.c.bf16 %v949, %v947
        %v968 = vpack.c.bf16 %v950, %v948
        %v969 = vpack.c.bf16 %v953, %v951
        %v970 = vpack.c.bf16 %v954, %v952
        %v971 = vld [vmem:[%s447] sm:$0xf]
        %v972 = vld [vmem:[%s447 + $0x4] sm:$0xf]
        %v973 = vld [vmem:[%s447 + $0x8] sm:$0xf]
        %v974 = vld [vmem:[%s447 + $0xc] sm:$0xf]
        %v975 = vld [vmem:[%s447 + $0x10] sm:$0xf]
        %v976 = vld [vmem:[%s447 + $0x14] sm:$0xf]
        %v977 = vld [vmem:[%s447 + $0x18] sm:$0xf]
        %v978 = vld [vmem:[%s447 + $0x1c] sm:$0xf]
        %v979 = vld [vmem:[%s447 + $0x20] sm:$0xf]
        %v980 = vld [vmem:[%s447 + $0x24] sm:$0xf]
        %v981 = vld [vmem:[%s447 + $0x28] sm:$0xf]
        %v982 = vld [vmem:[%s447 + $0x2c] sm:$0xf]
        %v983 = vld [vmem:[%s447 + $0x30] sm:$0xf]
        %v984 = vld [vmem:[%s447 + $0x34] sm:$0xf]
        %v985 = vld [vmem:[%s447 + $0x38] sm:$0xf]
        %v986 = vld [vmem:[%s447 + $0x3c] sm:$0xf]
        %v987 = vld [vmem:[%s447 + $0x40] sm:$0xf]
        %v988 = vld [vmem:[%s447 + $0x44] sm:$0xf]
        %v989 = vld [vmem:[%s447 + $0x48] sm:$0xf]
        %v990 = vld [vmem:[%s447 + $0x4c] sm:$0xf]
        %v991 = vld [vmem:[%s447 + $0x50] sm:$0xf]
        %v992 = vld [vmem:[%s447 + $0x54] sm:$0xf]
        %v993 = vld [vmem:[%s447 + $0x58] sm:$0xf]
        %v994 = vld [vmem:[%s447 + $0x5c] sm:$0xf]
        %v995 = vld [vmem:[%s447 + $0x60] sm:$0xf]
        %v996 = vld [vmem:[%s447 + $0x64] sm:$0xf]
        %v997 = vld [vmem:[%s447 + $0x68] sm:$0xf]
        %v998 = vld [vmem:[%s447 + $0x6c] sm:$0xf]
        %v999 = vld [vmem:[%s447 + $0x70] sm:$0xf]
        %v1000 = vld [vmem:[%s447 + $0x74] sm:$0xf]
        %v1001 = vld [vmem:[%s447 + $0x78] sm:$0xf]
        %v1002 = vld [vmem:[%s447 + $0x7c] sm:$0xf]
        %v1035 = vunpack.c.l.b16 %v971
        %v1036 = vunpack.c.l.b16 %v972
        %v1037 = vunpack.c.l.b16 %v973
        %v1038 = vunpack.c.l.b16 %v974
        %v1039 = vunpack.c.l.b16 %v975
        %v1040 = vunpack.c.l.b16 %v976
        %v1041 = vunpack.c.l.b16 %v977
        %v1042 = vunpack.c.l.b16 %v978
        %v1043 = vunpack.c.l.b16 %v979
        %v1044 = vunpack.c.l.b16 %v980
        %v1045 = vunpack.c.l.b16 %v981
        %v1046 = vunpack.c.l.b16 %v982
        %v1047 = vunpack.c.l.b16 %v983
        %v1048 = vunpack.c.l.b16 %v984
        %v1049 = vunpack.c.l.b16 %v985
        %v1050 = vunpack.c.l.b16 %v986
        %v1051 = vunpack.c.l.b16 %v987
        %v1052 = vunpack.c.l.b16 %v988
        %v1053 = vunpack.c.l.b16 %v989
        %v1054 = vunpack.c.l.b16 %v990
        %v1055 = vunpack.c.l.b16 %v991
        %v1056 = vunpack.c.l.b16 %v992
        %v1057 = vunpack.c.l.b16 %v993
        %v1058 = vunpack.c.l.b16 %v994
        %v1059 = vunpack.c.l.b16 %v995
        %v1060 = vunpack.c.l.b16 %v996
        %v1061 = vunpack.c.l.b16 %v997
        %v1062 = vunpack.c.l.b16 %v998
        %v1063 = vunpack.c.l.b16 %v999
        %v1064 = vunpack.c.l.b16 %v1000
        %v1065 = vunpack.c.l.b16 %v1001
        %v1066 = vunpack.c.l.b16 %v1002
        %v1067 = vpack.c.b16 %v1036, %v1035
        %v1068 = vpack.c.b16 %v1038, %v1037
        %v1069 = vpack.c.b16 %v1040, %v1039
        %v1070 = vpack.c.b16 %v1042, %v1041
        %v1071 = vpack.c.b16 %v1044, %v1043
        %v1072 = vpack.c.b16 %v1046, %v1045
        %v1073 = vpack.c.b16 %v1048, %v1047
        %v1074 = vpack.c.b16 %v1050, %v1049
        %v1075 = vpack.c.b16 %v1052, %v1051
        %v1076 = vpack.c.b16 %v1054, %v1053
        %v1077 = vpack.c.b16 %v1056, %v1055
        %v1078 = vpack.c.b16 %v1058, %v1057
        %v1079 = vpack.c.b16 %v1060, %v1059
        %v1080 = vpack.c.b16 %v1062, %v1061
        %v1081 = vpack.c.b16 %v1064, %v1063
        %v1082 = vpack.c.b16 %v1066, %v1065
        %1099 = vmatprep.subr.bf16.mxu0 0
        %1100 = vmatpush1.bf16.msra.mxu0 %v1074
        %1101 = vmatprep.subr.bf16.mxu0 0
        %1102 = vmatpush1.bf16.msra.mxu0 %v1073
        %1103 = vmatprep.subr.bf16.mxu0 0
        %1104 = vmatpush1.bf16.msra.mxu0 %v1072
        %1105 = vmatprep.subr.bf16.mxu0 0
        %1106 = vmatpush1.bf16.msra.mxu0 %v1071
        %1107 = vmatprep.subr.bf16.mxu0 0
        %1108 = vmatpush1.bf16.msra.mxu0 %v1070
        %1109 = vmatprep.subr.bf16.mxu0 0
        %1110 = vmatpush1.bf16.msra.mxu0 %v1069
        %1111 = vmatprep.subr.bf16.mxu0 0
        %1112 = vmatpush1.bf16.msra.mxu0 %v1068
        %1113 = vmatprep.subr.bf16.mxu0 0
        %1114 = vmatpush1.bf16.msra.mxu0 %v1067
        %1115 = vmatprep.subr.bf16.mxu0 0
        %1116 = vmatpush2.bf16.msra.mxu0 %v1082
        %1117 = vmatprep.subr.bf16.mxu0 0
        %1118 = vmatpush2.bf16.msra.mxu0 %v1081
        %1119 = vmatprep.subr.bf16.mxu0 0
        %1120 = vmatpush2.bf16.msra.mxu0 %v1080
        %1121 = vmatprep.subr.bf16.mxu0 0
        %1122 = vmatpush2.bf16.msra.mxu0 %v1079
        %1123 = vmatprep.subr.bf16.mxu0 0
        %1124 = vmatpush2.bf16.msra.mxu0 %v1078
        %1125 = vmatprep.subr.bf16.mxu0 0
        %1126 = vmatpush2.bf16.msra.mxu0 %v1077
        %1127 = vmatprep.subr.bf16.mxu0 0
        %1128 = vmatpush2.bf16.msra.mxu0 %v1076
        %1129 = vmatprep.subr.bf16.mxu0 0
        %1130 = vmatpush2.bf16.msra.mxu0 %v1075
        %1131 = vmatprep.mubr.bf16.mxu0 %v964
        %1132 = vmatmul.mubr.bf16.gmra.mxu0 %v963
        %v1133 = vpop.f32.mrf.mxu0
        %v1134 = vadd.f32 0.0, %v1133
        %v1135 = vpop.f32.mrf.mxu0
        %v1136 = vpop.f32.mrf.mxu0
        %v1137 = vadd.f32 0.0, %v1136
        %v1138 = vpop.f32.mrf.mxu0
        %1139 = vmatprep.mubr.bf16.mxu0 %v966
        %1140 = vmatmul.mubr.bf16.gmra.mxu0 %v965
        %v1141 = vpop.f32.mrf.mxu0
        %v1142 = vadd.f32 0.0, %v1141
        %v1143 = vpop.f32.mrf.mxu0
        %v1144 = vpop.f32.mrf.mxu0
        %v1145 = vadd.f32 0.0, %v1144
        %v1146 = vpop.f32.mrf.mxu0
        %1147 = vmatprep.mubr.bf16.mxu0 %v968
        %1148 = vmatmul.mubr.bf16.gmra.mxu0 %v967
        %v1149 = vpop.f32.mrf.mxu0
        %v1150 = vadd.f32 0.0, %v1149
        %v1151 = vpop.f32.mrf.mxu0
        %v1152 = vpop.f32.mrf.mxu0
        %v1153 = vadd.f32 0.0, %v1152
        %v1154 = vpop.f32.mrf.mxu0
        %1155 = vmatprep.mubr.bf16.mxu0 %v970
        %1156 = vmatmul.mubr.bf16.gmra.mxu0 %v969
        %v1157 = vpop.f32.mrf.mxu0
        %v1158 = vadd.f32 0.0, %v1157
        %v1159 = vpop.f32.mrf.mxu0
        %v1160 = vpop.f32.mrf.mxu0
        %v1161 = vadd.f32 0.0, %v1160
        %v1162 = vpop.f32.mrf.mxu0
        %1163 = vdwg.mxu0
        %v1164 = vadd.f32 %v955, %v1134
        %v1165 = vadd.f32 %v956, %v1137
        %v1166 = vadd.f32 %v957, %v1142
        %v1167 = vadd.f32 %v958, %v1145
        %v1168 = vadd.f32 %v959, %v1150
        %v1169 = vadd.f32 %v960, %v1153
        %v1170 = vadd.f32 %v961, %v1158
        %v1171 = vadd.f32 %v962, %v1161
        %1172 = vst [vmem:[#allocation3] sm:$0xff] %v1164
        %1173 = vst [vmem:[#allocation3 + $0x8] sm:$0xff] %v1165
        %1174 = vst [vmem:[#allocation3 + $0x10] sm:$0xff] %v1166
        %1175 = vst [vmem:[#allocation3 + $0x18] sm:$0xff] %v1167
        %1176 = vst [vmem:[#allocation3 + $0x20] sm:$0xff] %v1168
        %1177 = vst [vmem:[#allocation3 + $0x28] sm:$0xff] %v1169
        %1178 = vst [vmem:[#allocation3 + $0x30] sm:$0xff] %v1170
        %1179 = vst [vmem:[#allocation3 + $0x38] sm:$0xff] %v1171
        %p1180 = scmp.eq.s32.totalorder %s26, 1
        // Predicated region
        $region91: #{feedforward.1} parent=81 // pred_check
          %p1181 = pneg %p1180
        $region92: #{feedforward.1} parent=81 // pred_check_branch
          %1183 = sbr.rel (%p1181) target = $region94
        $region93: #{feedforward.1} parent=81 // pred_region
          %v1184 = vld [vmem:[#allocation3] sm:$0xff]
          %v1185 = vld [vmem:[#allocation3 + $0x8] sm:$0xff]
          %v1186 = vld [vmem:[#allocation3 + $0x10] sm:$0xff]
          %v1187 = vld [vmem:[#allocation3 + $0x18] sm:$0xff]
          %v1188 = vld [vmem:[#allocation3 + $0x20] sm:$0xff]
          %v1189 = vld [vmem:[#allocation3 + $0x28] sm:$0xff]
          %v1190 = vld [vmem:[#allocation3 + $0x30] sm:$0xff]
          %v1191 = vld [vmem:[#allocation3 + $0x38] sm:$0xff]
          %v1192 = vld [vmem:[%s6] sm:$0x1]
          %v1194 = vlaneseq
          %v1195 = vshrl.u32 %v1194, 7
          %v1196 = vsub.s32 0, %v1195
          %v1197 = vrot.slane %v1192, %v1196
          %v1199 = vadd.f32 %v1184, %v1197
          %v1200 = vadd.f32 %v1185, %v1197
          %v1201 = vadd.f32 %v1186, %v1197
          %v1202 = vadd.f32 %v1187, %v1197
          %v1203 = vadd.f32 %v1188, %v1197
          %v1204 = vadd.f32 %v1189, %v1197
          %v1205 = vadd.f32 %v1190, %v1197
          %v1206 = vadd.f32 %v1191, %v1197
          %1207 = vst [vmem:[%s430] sm:$0xff] %v1199
          %1208 = vst [vmem:[%s430 + $0x8] sm:$0xff] %v1200
          %1209 = vst [vmem:[%s430 + $0x10] sm:$0xff] %v1201
          %1210 = vst [vmem:[%s430 + $0x18] sm:$0xff] %v1202
          %1211 = vst [vmem:[%s430 + $0x20] sm:$0xff] %v1203
          %1212 = vst [vmem:[%s430 + $0x28] sm:$0xff] %v1204
          %1213 = vst [vmem:[%s430 + $0x30] sm:$0xff] %v1205
          %1214 = vst [vmem:[%s430 + $0x38] sm:$0xff] %v1206
        $region94: #{feedforward.1} parent=81 // pred_fallthru
          _
        %s1215 = sand.u32 %s208, 1
        %s1216 = scalar_lea.sflag [#allocation6], %s1215
        %s1217 = sand.u32 %s208, 1
        %s1218 = smul.addr %s1217, 64
        %s1219 = scalar_lea.vmem [#allocation5], %s1218
        // Predicated region
        $region95: #{feedforward.1} parent=81 // pred_check
          %p1220 = pneg %p218
        $region96: #{feedforward.1} parent=81 // pred_check_branch
          %1222 = sbr.rel (%p1220) target = $region98
        $region97: #{feedforward.1} parent=81 // pred_region
          %s1223 = smul.u32 8, %s25
          %s1225 = ssub.s32 1024, 1024
          %1226 = vsyncadd %s1216, %s1225
          %s1227 = smul.addr %s1223, 128
          %s1228 = scalar_lea.hbm %s7, %s1227
          %s1229 = sshll.u32 %s1219, 4
          %s1230 = int_to_ptr.vmem [resolvable:$true] %s1229
          %1235 = dma.vmem_to_hbm [thread:$0]  %s1230, 1024, %s1228, %s1216, 128, 128, 8
        $region98: #{feedforward.1} parent=81 // pred_fallthru
          _
      $region82: #{feedforward.1} parent=5 // pred_fallthru
        _
      %p1236 = scmp.le.s32.totalorder 2, %s16
      // Predicated region
      $region99: #{feedforward.1} parent=5 // pred_check
        %p1237 = pneg %p1236
      $region100: #{feedforward.1} parent=5 // pred_check_branch
        %1239 = sbr.rel (%p1237) target = $region102
      $region101: #{feedforward.1} parent=5 // pred_region
        %s1240 = ssub.s32 %s16, 2
        // Predicated region
        $region103: #{feedforward.1} parent=101 // pred_check
          %p1241 = pneg %p224
        $region104: #{feedforward.1} parent=101 // pred_check_branch
          %1243 = sbr.rel (%p1241) target = $region106
        $region105: #{feedforward.1} parent=101 // pred_region
          %s1244 = sand.u32 %s209, 1
          %s1245 = scalar_lea.sflag [#allocation6], %s1244
          %s1246 = sand.u32 %s209, 1
          %s1247 = smul.addr %s1246, 64
          %s1248 = scalar_lea.vmem [#allocation5], %s1247
          %1249 = dma.done %s1245, 1024
        $region106: #{feedforward.1} parent=101 // pred_fallthru
          _
      $region102: #{feedforward.1} parent=5 // pred_fallthru
        _
    $region6: #{feedforward.1} parent=1 // loop_footer
      %s20 = sadd.s32 1, %s16
    $region7: #{feedforward.1} parent=1 // loop_footer_branch
      %15 = sbr.rel target = $region3
    $region8: #{feedforward.1} parent=1 // loop_exit
      _
    %1250 = vsyncpa [#allocation6], 1
    %s1251 = scalar_lea.sflag [#allocation6], 1
    %1252 = vsyncpa %s1251, 1

</llo_original>
